<compile_context>
chip_gen: v7x
topology: tpu7x:2x2x1
jax: 0.10.0
libtpu: 0.0.40
codegen_flags: <defaults>
</compile_context>

<pallas_src>
import jax
import jax.numpy as jnp
from jax.experimental import pallas as pl
from jax.experimental.pallas import tpu as pltpu

PROJ_DIM = 512  # fixed by the module


def generator_mlp_kernel(noise_ref, emb_ref, w1n_ref, w1e_ref, b1_ref,
                         w2_ref, b2_ref, o_ref):
    # Layer 1: concat([noise, emb]) @ W1 split into two bf16 MXU matmuls.
    h = jnp.dot(noise_ref[...].astype(jnp.bfloat16), w1n_ref[...],
                preferred_element_type=jnp.float32)
    h = h + jnp.dot(emb_ref[...].astype(jnp.bfloat16), w1e_ref[...],
                    preferred_element_type=jnp.float32)
    h = h + b1_ref[...]                       # bias add in f32
    h = jnp.where(h > 0, h, 0.01 * h)         # LeakyReLU (PyTorch default 0.01)
    # Layer 2: (TB, 512) @ (512, TN) in bf16, f32 accumulate.
    out = jnp.dot(h.astype(jnp.bfloat16), w2_ref[...],
                  preferred_element_type=jnp.float32)
    o_ref[...] = (out + b2_ref[...]).astype(o_ref.dtype)


def _round_up(x, m):
    return (x + m - 1) // m * m


def base_generator_forward(batch_ent_emb, params, noise_key, noise_dim,
                           *, tb=256, tn=1024):
    """Pallas implementation of BaseGenerator.forward.

    params = (W1[in, 512], b1[1, 512], W2[512, img_dim], b2[1, img_dim]),
    W stored [in, out] (transpose of PyTorch's [out, in]).
    """
    w1, b1, w2, b2 = params
    B, structure_dim = batch_ent_emb.shape
    proj_dim, img_dim = w2.shape
    dtype = batch_ent_emb.dtype

    # Glue: noise generation (plain JAX). The concat itself is folded into the
    # kernel by splitting W1 along its input dimension.
    # TODO(synk): generate the noise in-kernel (pltpu.prng_seed +
    # pltpu.stateful_normal) to drop the (B, noise_dim) HBM array entirely.
    noise = jax.random.normal(noise_key, (B, noise_dim), dtype=dtype)

    # One-time weight prep (would live at init in a real deployment):
    # split W1 (mirrors the concat) and pre-cast weights to bf16 for the MXU.
    w1n = w1[:noise_dim].astype(jnp.bfloat16)
    w1e = w1[noise_dim:].astype(jnp.bfloat16)
    b1f = b1.astype(jnp.float32)

    # Lane-dense output: pad the N dim to a multiple of 128 (full vst stores),
    # slice the padding off after the kernel.
    n_pad = _round_up(img_dim, 128)
    w2p = jnp.pad(w2, ((0, 0), (0, n_pad - img_dim))).astype(jnp.bfloat16)
    b2p = jnp.pad(b2, ((0, 0), (0, n_pad - img_dim))).astype(jnp.float32)

    tb = min(tb, B)
    tn = min(tn, n_pad)
    grid = (pl.cdiv(B, tb), pl.cdiv(n_pad, tn))

    out = pl.pallas_call(
        generator_mlp_kernel,
        out_shape=jax.ShapeDtypeStruct((B, n_pad), dtype),
        grid_spec=pl.GridSpec(
            grid=grid,
            in_specs=[
                # Activations: tiled along the batch axis.
                pl.BlockSpec((tb, noise_dim), lambda i, j: (i, 0)),
                pl.BlockSpec((tb, structure_dim), lambda i, j: (i, 0)),
                # Layer-1 weights/bias: constant index -> resident in VMEM.
                pl.BlockSpec((noise_dim, proj_dim), lambda i, j: (0, 0)),
                pl.BlockSpec((structure_dim, proj_dim), lambda i, j: (0, 0)),
                pl.BlockSpec((1, proj_dim), lambda i, j: (0, 0)),
                # Layer-2 weights/bias: tiled along the output (N) axis.
                pl.BlockSpec((proj_dim, tn), lambda i, j: (0, j)),
                pl.BlockSpec((1, tn), lambda i, j: (0, j)),
            ],
            out_specs=pl.BlockSpec((tb, tn), lambda i, j: (i, j)),
        ),
        compiler_params=pltpu.CompilerParams(
            dimension_semantics=("parallel", "parallel")),
    )(noise, batch_ent_emb, w1n, w1e, b1f, w2p, b2p)

    return out[:, :img_dim]


def init_params(key, noise_dim, structure_dim, img_dim, proj_dim=PROJ_DIM,
                dtype=jnp.float32):
    """Deterministic synthetic init matching nn.Linear shapes.
    W stored as [in, out] (transpose of PyTorch's [out, in])."""
    in_dim = noise_dim + structure_dim
    k1, k2, k3, k4 = jax.random.split(key, 4)
    lim1 = 1.0 / jnp.sqrt(in_dim)
    lim2 = 1.0 / jnp.sqrt(proj_dim)
    w1 = jax.random.uniform(k1, (in_dim, proj_dim), dtype, -lim1, lim1)
    b1 = jax.random.uniform(k2, (1, proj_dim), dtype, -lim1, lim1)
    w2 = jax.random.uniform(k3, (proj_dim, img_dim), dtype, -lim2, lim2)
    b2 = jax.random.uniform(k4, (1, img_dim), dtype, -lim2, lim2)
    return (w1, b1, w2, b2)


if __name__ == "__main__":
    noise_dim = 16
    structure_dim = 16
    img_dim = 32
    batch = 8

    key = jax.random.PRNGKey(0)
    k_param, k_emb, k_noise = jax.random.split(key, 3)

    params = init_params(k_param, noise_dim, structure_dim, img_dim)
    batch_ent_emb = jax.random.normal(k_emb, (batch, structure_dim),
                                      dtype=jnp.float32)

    out = base_generator_forward(batch_ent_emb, params, k_noise, noise_dim)
    out = jax.block_until_ready(out)

    assert out.shape == (batch, img_dim), out.shape
    assert out.dtype == jnp.float32, out.dtype

    # Pure-JAX f32 reference with identical noise. Tolerance is loosened
    # because the kernel runs its matmuls on the MXU in bf16 (f32 accumulate).
    noise = jax.random.normal(k_noise, (batch, noise_dim), dtype=jnp.float32)
    x = jnp.concatenate([noise, batch_ent_emb], axis=-1)
    w1, b1, w2, b2 = params
    h = x @ w1 + b1
    h = jnp.where(h > 0, h, 0.01 * h)
    ref = h @ w2 + b2
    err = jnp.max(jnp.abs(out - ref))
    assert jnp.allclose(out, ref, atol=5e-2, rtol=5e-2), float(err)

    print("KERNEL_OK")
</pallas_src>

<mosaic_0001>
module attributes {stable_mosaic.version = 11 : i64} {
  func.func @generator_mlp_kernel(%arg0: i32, %arg1: i32, %arg2: memref<8x16xf32, #tpu.memory_space<vmem>>, %arg3: memref<8x16xf32, #tpu.memory_space<vmem>>, %arg4: memref<16x512xbf16, #tpu.memory_space<vmem>>, %arg5: memref<16x512xbf16, #tpu.memory_space<vmem>>, %arg6: memref<1x512xf32, #tpu.memory_space<vmem>>, %arg7: memref<512x128xbf16, #tpu.memory_space<vmem>>, %arg8: memref<1x128xf32, #tpu.memory_space<vmem>>, %arg9: memref<8x128xf32, #tpu.memory_space<vmem>>) attributes {dimension_semantics = [#tpu.dimension_semantics<parallel>, #tpu.dimension_semantics<parallel>], iteration_bounds = array<i64: 1, 1>, scalar_prefetch = 0 : i64, scratch_operands = 0 : i64, tpu.core_type = #tpu.core_type<tc>, window_params = [{transform_indices = @transform_0, window_bounds = array<i64: 8, 16>}, {transform_indices = @transform_1, window_bounds = array<i64: 8, 16>}, {pipeline_mode = #tpu.pipeline_mode<synchronous>, transform_indices = @transform_2, window_bounds = array<i64: 16, 512>}, {pipeline_mode = #tpu.pipeline_mode<synchronous>, transform_indices = @transform_3, window_bounds = array<i64: 16, 512>}, {pipeline_mode = #tpu.pipeline_mode<synchronous>, transform_indices = @transform_4, window_bounds = array<i64: 1, 512>}, {transform_indices = @transform_5, window_bounds = array<i64: 512, 128>}, {transform_indices = @transform_6, window_bounds = array<i64: 1, 128>}, {transform_indices = @transform_7, window_bounds = array<i64: 8, 128>}]} {
    %c0 = arith.constant 0 : index
    %c0_0 = arith.constant 0 : index
    %0 = vector.load %arg2[%c0, %c0_0] : memref<8x16xf32, #tpu.memory_space<vmem>>, vector<8x16xf32>
    %1 = arith.truncf %0 : vector<8x16xf32> to vector<8x16xbf16>
    %c0_1 = arith.constant 0 : index
    %c0_2 = arith.constant 0 : index
    %2 = vector.load %arg4[%c0_1, %c0_2] : memref<16x512xbf16, #tpu.memory_space<vmem>>, vector<16x512xbf16>
    %cst = arith.constant dense<0.000000e+00> : vector<8x512xf32>
    %3 = tpu.matmul %1, %2, %cst {dimension_numbers = #tpu.dot_dimension_numbers<[1], [0], [0], [1], [0, 0, 1, 1], [], []>} : vector<8x16xbf16>, vector<16x512xbf16>, vector<8x512xf32> -> vector<8x512xf32>
    %c0_3 = arith.constant 0 : index
    %c0_4 = arith.constant 0 : index
    %4 = vector.load %arg3[%c0_3, %c0_4] : memref<8x16xf32, #tpu.memory_space<vmem>>, vector<8x16xf32>
    %5 = arith.truncf %4 : vector<8x16xf32> to vector<8x16xbf16>
    %c0_5 = arith.constant 0 : index
    %c0_6 = arith.constant 0 : index
    %6 = vector.load %arg5[%c0_5, %c0_6] : memref<16x512xbf16, #tpu.memory_space<vmem>>, vector<16x512xbf16>
    %cst_7 = arith.constant dense<0.000000e+00> : vector<8x512xf32>
    %7 = tpu.matmul %5, %6, %cst_7 {dimension_numbers = #tpu.dot_dimension_numbers<[1], [0], [0], [1], [0, 0, 1, 1], [], []>} : vector<8x16xbf16>, vector<16x512xbf16>, vector<8x512xf32> -> vector<8x512xf32>
    %8 = arith.addf %3, %7 : vector<8x512xf32>
    %c0_8 = arith.constant 0 : index
    %c0_9 = arith.constant 0 : index
    %9 = vector.load %arg6[%c0_8, %c0_9] : memref<1x512xf32, #tpu.memory_space<vmem>>, vector<1x512xf32>
    %10 = vector.broadcast %9 : vector<1x512xf32> to vector<8x512xf32>
    %11 = arith.addf %8, %10 : vector<8x512xf32>
    %cst_10 = arith.constant 0.000000e+00 : f32
    %12 = vector.broadcast %cst_10 : f32 to vector<8x512xf32>
    %13 = arith.cmpf ogt, %11, %12 : vector<8x512xf32>
    %cst_11 = arith.constant 0.00999999977 : f32
    %14 = vector.broadcast %cst_11 : f32 to vector<8x512xf32>
    %15 = arith.mulf %14, %11 : vector<8x512xf32>
    %16 = arith.select %13, %11, %15 : vector<8x512xi1>, vector<8x512xf32>
    %17 = arith.truncf %16 : vector<8x512xf32> to vector<8x512xbf16>
    %c0_12 = arith.constant 0 : index
    %c0_13 = arith.constant 0 : index
    %18 = vector.load %arg7[%c0_12, %c0_13] : memref<512x128xbf16, #tpu.memory_space<vmem>>, vector<512x128xbf16>
    %cst_14 = arith.constant dense<0.000000e+00> : vector<8x128xf32>
    %19 = tpu.matmul %17, %18, %cst_14 {dimension_numbers = #tpu.dot_dimension_numbers<[1], [0], [0], [1], [0, 0, 1, 1], [], []>} : vector<8x512xbf16>, vector<512x128xbf16>, vector<8x128xf32> -> vector<8x128xf32>
    %c0_15 = arith.constant 0 : index
    %c0_16 = arith.constant 0 : index
    %20 = vector.load %arg8[%c0_15, %c0_16] : memref<1x128xf32, #tpu.memory_space<vmem>>, vector<1x128xf32>
    %21 = vector.broadcast %20 : vector<1x128xf32> to vector<8x128xf32>
    %22 = arith.addf %19, %21 : vector<8x128xf32>
    %c0_17 = arith.constant 0 : index
    %c0_18 = arith.constant 0 : index
    %23 = vector.load %arg9[%c0_17, %c0_18] : memref<8x128xf32, #tpu.memory_space<vmem>>, vector<8x128xf32>
    tpu.vector_store %arg9[%c0_17, %c0_18], %22 {strides = array<i32>} : memref<8x128xf32, #tpu.memory_space<vmem>>, vector<8x128xf32>,
    return
  }
  func.func @transform_0(%arg0: i32, %arg1: i32) -> (i32, i32) {
    %c0_i32 = arith.constant 0 : i32
    %c0_i32_0 = arith.constant 0 : i32
    return %arg0, %c0_i32 : i32, i32
  }
  func.func @transform_1(%arg0: i32, %arg1: i32) -> (i32, i32) {
    %c0_i32 = arith.constant 0 : i32
    %c0_i32_0 = arith.constant 0 : i32
    return %arg0, %c0_i32 : i32, i32
  }
  func.func @transform_2(%arg0: i32, %arg1: i32) -> (i32, i32) {
    %c0_i32 = arith.constant 0 : i32
    %c0_i32_0 = arith.constant 0 : i32
    %c0_i32_1 = arith.constant 0 : i32
    return %c0_i32, %c0_i32_0 : i32, i32
  }
  func.func @transform_3(%arg0: i32, %arg1: i32) -> (i32, i32) {
    %c0_i32 = arith.constant 0 : i32
    %c0_i32_0 = arith.constant 0 : i32
    %c0_i32_1 = arith.constant 0 : i32
    return %c0_i32, %c0_i32_0 : i32, i32
  }
  func.func @transform_4(%arg0: i32, %arg1: i32) -> (i32, i32) {
    %c0_i32 = arith.constant 0 : i32
    %c0_i32_0 = arith.constant 0 : i32
    %c0_i32_1 = arith.constant 0 : i32
    return %c0_i32, %c0_i32_0 : i32, i32
  }
  func.func @transform_5(%arg0: i32, %arg1: i32) -> (i32, i32) {
    %c0_i32 = arith.constant 0 : i32
    %c0_i32_0 = arith.constant 0 : i32
    return %c0_i32, %arg1 : i32, i32
  }
  func.func @transform_6(%arg0: i32, %arg1: i32) -> (i32, i32) {
    %c0_i32 = arith.constant 0 : i32
    %c0_i32_0 = arith.constant 0 : i32
    return %c0_i32, %arg1 : i32, i32
  }
  func.func @transform_7(%arg0: i32, %arg1: i32) -> (i32, i32) {
    %c0_i32 = arith.constant 0 : i32
    return %arg0, %arg1 : i32, i32
  }
}

</mosaic_0001>

<llo_original>
// kernel: tpu_custom_call.1
$region0: #{tpu_custom_call.1}
  #allocation0 [shape = 'u32[]', space=smem, size = 0x4, offset = 0x4, fixed_abs, tag = 'smem constant byte address 0x4 - core index']
  #allocation1 [shape = 'u32[144,128]{1,0:T(1,128)}', space=vmem, size = 0x12000, scoped, tag = 'internal scratch']
  %s0 = inlined_call_operand.hbm [shape: f32[8,16], index: 0, kind: input, shape index: {}]
  %s1 = inlined_call_operand.hbm [shape: f32[8,16], index: 1, kind: input, shape index: {}]
  %s2 = inlined_call_operand.hbm [shape: bf16[16,512], index: 2, kind: input, shape index: {}]
  %s3 = inlined_call_operand.hbm [shape: bf16[16,512], index: 3, kind: input, shape index: {}]
  %s4 = inlined_call_operand.vmem [shape: f32[1,512], index: 4, kind: input, shape index: {}]
  %s5 = inlined_call_operand.hbm [shape: bf16[512,128], index: 5, kind: input, shape index: {}]
  %s6 = inlined_call_operand.vmem [shape: f32[1,128], index: 6, kind: input, shape index: {}]
  %s7 = inlined_call_operand.hbm [shape: f32[8,128], index: 7, kind: output, shape index: {}]
  %s8 = sld [smem:[#allocation0]]
  $region58: #{tpu_custom_call.1} parent=0
    _
  %s10 = ssub.s32 1, %s8
  %s11 = scalar_select 0, %s10, %s8
  $region1: #{tpu_custom_call.1} parent=0
    #allocation2 [shape = 'u8[4096]{0}', space=vmem, size = 0x1000, scoped, tag = 'input window, operand 0, single buffered']
    #allocation3 [shape = 's32[1]{0}', space=sflag, size = 0x4, scoped, tag = 'scoped memory for tpu_custom_call.1']
    #allocation4 [shape = 's32[1]{0}', space=sflag, size = 0x4, scoped, tag = 'scoped memory for tpu_custom_call.1']
    #allocation5 [shape = 'u8[4096]{0}', space=vmem, size = 0x1000, scoped, tag = 'input window, operand 1, single buffered']
    #allocation6 [shape = 's32[1]{0}', space=sflag, size = 0x4, scoped, tag = 'scoped memory for tpu_custom_call.1']
    #allocation7 [shape = 'u8[16384]{0}', space=vmem, size = 0x4000, scoped, tag = 'input window, operand 2, single buffered']
    #allocation8 [shape = 'u8[16384]{0}', space=vmem, size = 0x4000, scoped, tag = 'input window, operand 3, single buffered']
    #allocation9 [shape = 's32[1]{0}', space=sflag, size = 0x4, scoped, tag = 'scoped memory for tpu_custom_call.1']
    #allocation10 [shape = 'u8[131072]{0}', space=vmem, size = 0x20000, scoped, tag = 'input window, operand 5, single buffered']
    #allocation11 [shape = 'u8[4096]{0}', space=vmem, size = 0x1000, scoped, tag = 'output window, operand 0, single buffered']
    %12 = vsyncpa [#allocation3], 0
    %13 = vsyncpa [#allocation6], 0
    %14 = vsyncpa [#allocation9], 0
    %15 = vsyncpa [#allocation4], 0
    // Predicated region
    $region2: #{tpu_custom_call.1} parent=1 // pred_check
      _
    $region3: #{tpu_custom_call.1} parent=1 // pred_check_branch
      %17 = sbr.rel (0) target = $region5
    $region4: #{tpu_custom_call.1} parent=1 // pred_region
      %s19 = ssub.s32 128, 128
      %20 = vsyncadd [#allocation3], %s19
      %s22 = sshll.u32 [#allocation2], 4
      %s23 = int_to_ptr.vmem [resolvable:$true] %s22
      %25 = dma.hbm_to_vmem [thread:$0]  %s0, 128, %s23, [#allocation3]
    $region5: #{tpu_custom_call.1} parent=1 // pred_fallthru
      _
    // Predicated region
    $region6: #{tpu_custom_call.1} parent=1 // pred_check
      _
    $region7: #{tpu_custom_call.1} parent=1 // pred_check_branch
      %27 = sbr.rel (0) target = $region9
    $region8: #{tpu_custom_call.1} parent=1 // pred_region
      %s29 = ssub.s32 128, 128
      %30 = vsyncadd [#allocation6], %s29
      %s32 = sshll.u32 [#allocation5], 4
      %s33 = int_to_ptr.vmem [resolvable:$true] %s32
      %35 = dma.hbm_to_vmem [thread:$0]  %s1, 128, %s33, [#allocation6]
    $region9: #{tpu_custom_call.1} parent=1 // pred_fallthru
      _
    // Predicated region
    $region10: #{tpu_custom_call.1} parent=1 // pred_check
      _
    $region11: #{tpu_custom_call.1} parent=1 // pred_check_branch
      %37 = sbr.rel (0) target = $region13
    $region12: #{tpu_custom_call.1} parent=1 // pred_region
      %s39 = ssub.s32 512, 512
      %40 = vsyncadd [#allocation6], %s39
      %s41 = sshll.u32 [#allocation7], 4
      %s42 = int_to_ptr.vmem [resolvable:$true] %s41
      %47 = dma.hbm_to_vmem [thread:$0]  %s2, 512, %s42, [#allocation6], 256, 256, 16
    $region13: #{tpu_custom_call.1} parent=1 // pred_fallthru
      _
    // Predicated region
    $region14: #{tpu_custom_call.1} parent=1 // pred_check
      _
    $region15: #{tpu_custom_call.1} parent=1 // pred_check_branch
      %49 = sbr.rel (0) target = $region17
    $region16: #{tpu_custom_call.1} parent=1 // pred_region
      %s51 = ssub.s32 512, 512
      %52 = vsyncadd [#allocation9], %s51
      %s53 = sshll.u32 [#allocation8], 4
      %s54 = int_to_ptr.vmem [resolvable:$true] %s53
      %59 = dma.hbm_to_vmem [thread:$0]  %s3, 512, %s54, [#allocation9], 256, 256, 16
    $region17: #{tpu_custom_call.1} parent=1 // pred_fallthru
      _
    // Predicated region
    $region18: #{tpu_custom_call.1} parent=1 // pred_check
      _
    $region19: #{tpu_custom_call.1} parent=1 // pred_check_branch
      %61 = sbr.rel (0) target = $region21
    $region20: #{tpu_custom_call.1} parent=1 // pred_region
      _
    $region21: #{tpu_custom_call.1} parent=1 // pred_fallthru
      _
    // Predicated region
    $region22: #{tpu_custom_call.1} parent=1 // pred_check
      _
    $region23: #{tpu_custom_call.1} parent=1 // pred_check_branch
      %63 = sbr.rel (0) target = $region25
    $region24: #{tpu_custom_call.1} parent=1 // pred_region
      %s65 = ssub.s32 4096, 4096
      %66 = vsyncadd [#allocation9], %s65
      %s67 = sshll.u32 [#allocation10], 4
      %s68 = int_to_ptr.vmem [resolvable:$true] %s67
      %73 = dma.hbm_to_vmem [thread:$0]  %s5, 4096, %s68, [#allocation9], 64, 64, 4
    $region25: #{tpu_custom_call.1} parent=1 // pred_fallthru
      _
    // Predicated region
    $region26: #{tpu_custom_call.1} parent=1 // pred_check
      _
    $region27: #{tpu_custom_call.1} parent=1 // pred_check_branch
      %75 = sbr.rel (0) target = $region29
    $region28: #{tpu_custom_call.1} parent=1 // pred_region
      _
    $region29: #{tpu_custom_call.1} parent=1 // pred_fallthru
      _
    // Predicated region
    $region30: #{tpu_custom_call.1} parent=1 // pred_check
      _
    $region31: #{tpu_custom_call.1} parent=1 // pred_check_branch
      %77 = sbr.rel (0) target = $region33
    $region32: #{tpu_custom_call.1} parent=1 // pred_region
      %78 = dma.done [#allocation3], 128
    $region33: #{tpu_custom_call.1} parent=1 // pred_fallthru
      _
    // Predicated region
    $region34: #{tpu_custom_call.1} parent=1 // pred_check
      _
    $region35: #{tpu_custom_call.1} parent=1 // pred_check_branch
      %80 = sbr.rel (0) target = $region37
    $region36: #{tpu_custom_call.1} parent=1 // pred_region
      %81 = dma.done [#allocation6], 128
    $region37: #{tpu_custom_call.1} parent=1 // pred_fallthru
      _
    // Predicated region
    $region38: #{tpu_custom_call.1} parent=1 // pred_check
      _
    $region39: #{tpu_custom_call.1} parent=1 // pred_check_branch
      %83 = sbr.rel (0) target = $region41
    $region40: #{tpu_custom_call.1} parent=1 // pred_region
      %84 = dma.done [#allocation6], 512
    $region41: #{tpu_custom_call.1} parent=1 // pred_fallthru
      _
    // Predicated region
    $region42: #{tpu_custom_call.1} parent=1 // pred_check
      _
    $region43: #{tpu_custom_call.1} parent=1 // pred_check_branch
      %86 = sbr.rel (0) target = $region45
    $region44: #{tpu_custom_call.1} parent=1 // pred_region
      %87 = dma.done [#allocation9], 512
    $region45: #{tpu_custom_call.1} parent=1 // pred_fallthru
      _
    // Predicated region
    $region46: #{tpu_custom_call.1} parent=1 // pred_check
      _
    $region47: #{tpu_custom_call.1} parent=1 // pred_check_branch
      %89 = sbr.rel (0) target = $region49
    $region48: #{tpu_custom_call.1} parent=1 // pred_region
      %90 = dma.done [#allocation9], 4096
    $region49: #{tpu_custom_call.1} parent=1 // pred_fallthru
      _
    %v92 = vld [vmem:[#allocation2] sm:$0xff]
    %v93 = vpack.c.bf16 %v92, %v92
    %v94 = vld [vmem:[#allocation7] sm:$0xff]
    %v95 = vld [vmem:[#allocation7 + $0x8] sm:$0xff]
    %v96 = vld [vmem:[#allocation7 + $0x10] sm:$0xff]
    %v97 = vld [vmem:[#allocation7 + $0x18] sm:$0xff]
    %v98 = vld [vmem:[#allocation5] sm:$0xff]
    %v99 = vpack.c.bf16 %v98, %v98
    %v100 = vld [vmem:[#allocation8] sm:$0xff]
    %v101 = vld [vmem:[#allocation8 + $0x8] sm:$0xff]
    %v102 = vld [vmem:[#allocation8 + $0x10] sm:$0xff]
    %v103 = vld [vmem:[#allocation8 + $0x18] sm:$0xff]
    %v108 = vunpack.c.l.b16 %v100
    %v109 = vunpack.c.h.b16 %v100
    %v110 = vunpack.c.l.b16 %v101
    %v111 = vunpack.c.h.b16 %v101
    %v112 = vunpack.c.l.b16 %v102
    %v113 = vunpack.c.h.b16 %v102
    %v114 = vunpack.c.l.b16 %v103
    %v115 = vunpack.c.h.b16 %v103
    %v116 = vpack.c.b16 %v112, %v108
    %v117 = vpack.c.b16 %v113, %v109
    %v118 = vpack.c.b16 %v114, %v110
    %v119 = vpack.c.b16 %v115, %v111
    %vm124 = vcmask 130048
    %v126 = vsel %vm124, %v99, 0
    %128 = vmatprep.subr.bf16.mxu0 %v117
    %129 = vmatpush1.bf16.msra.mxu0 %v116
    %130 = vmatprep.subr.bf16.mxu0 0
    %131 = vmatpush1.bf16.msra.mxu0 0
    %132 = vmatprep.subr.bf16.mxu0 0
    %133 = vmatpush1.bf16.msra.mxu0 0
    %134 = vmatprep.subr.bf16.mxu0 0
    %135 = vmatpush1.bf16.msra.mxu0 0
    %136 = vmatprep.subr.bf16.mxu0 0
    %137 = vmatpush1.bf16.msra.mxu0 0
    %138 = vmatprep.subr.bf16.mxu0 0
    %139 = vmatpush1.bf16.msra.mxu0 0
    %140 = vmatprep.subr.bf16.mxu0 0
    %141 = vmatpush1.bf16.msra.mxu0 0
    %142 = vmatprep.subr.bf16.mxu0 0
    %143 = vmatpush1.bf16.msra.mxu0 0
    %144 = vmatprep.subr.bf16.mxu0 0
    %145 = vmatpush1.bf16.msra.mxu0 0
    %146 = vmatprep.subr.bf16.mxu0 0
    %147 = vmatpush1.bf16.msra.mxu0 0
    %148 = vmatprep.subr.bf16.mxu0 0
    %149 = vmatpush1.bf16.msra.mxu0 0
    %150 = vmatprep.subr.bf16.mxu0 0
    %151 = vmatpush1.bf16.msra.mxu0 0
    %152 = vmatprep.subr.bf16.mxu0 0
    %153 = vmatpush1.bf16.msra.mxu0 0
    %154 = vmatprep.subr.bf16.mxu0 0
    %155 = vmatpush1.bf16.msra.mxu0 0
    %156 = vmatprep.subr.bf16.mxu0 0
    %157 = vmatpush1.bf16.msra.mxu0 0
    %158 = vmatprep.subr.bf16.mxu0 0
    %159 = vmatpush1.bf16.msra.mxu0 0
    %160 = vmatprep.mubr.bf16.mxu0 0
    %161 = vmatmul.mubr.bf16.gmra.mrb[0].mxu0 %v126
    %v162 = vpop.f32.mrb[0].mxu0
    %v163 = vadd.f32 0.0, %v162
    %v164 = vpop.f32.mrb[0].mxu0
    %v165 = vadd.f32 0.0, %v164
    %v166 = vpop.f32.mrb[0].mxu0
    %v167 = vpop.f32.mrb[0].mxu0
    %168 = vdwg.mxu0
    %169 = vmatprep.subr.bf16.mxu0 %v119
    %170 = vmatpush1.bf16.msra.mxu0 %v118
    %171 = vmatprep.subr.bf16.mxu0 0
    %172 = vmatpush1.bf16.msra.mxu0 0
    %173 = vmatprep.subr.bf16.mxu0 0
    %174 = vmatpush1.bf16.msra.mxu0 0
    %175 = vmatprep.subr.bf16.mxu0 0
    %176 = vmatpush1.bf16.msra.mxu0 0
    %177 = vmatprep.subr.bf16.mxu0 0
    %178 = vmatpush1.bf16.msra.mxu0 0
    %179 = vmatprep.subr.bf16.mxu0 0
    %180 = vmatpush1.bf16.msra.mxu0 0
    %181 = vmatprep.subr.bf16.mxu0 0
    %182 = vmatpush1.bf16.msra.mxu0 0
    %183 = vmatprep.subr.bf16.mxu0 0
    %184 = vmatpush1.bf16.msra.mxu0 0
    %185 = vmatprep.subr.bf16.mxu0 0
    %186 = vmatpush1.bf16.msra.mxu0 0
    %187 = vmatprep.subr.bf16.mxu0 0
    %188 = vmatpush1.bf16.msra.mxu0 0
    %189 = vmatprep.subr.bf16.mxu0 0
    %190 = vmatpush1.bf16.msra.mxu0 0
    %191 = vmatprep.subr.bf16.mxu0 0
    %192 = vmatpush1.bf16.msra.mxu0 0
    %193 = vmatprep.subr.bf16.mxu0 0
    %194 = vmatpush1.bf16.msra.mxu0 0
    %195 = vmatprep.subr.bf16.mxu0 0
    %196 = vmatpush1.bf16.msra.mxu0 0
    %197 = vmatprep.subr.bf16.mxu0 0
    %198 = vmatpush1.bf16.msra.mxu0 0
    %199 = vmatprep.subr.bf16.mxu0 0
    %200 = vmatpush1.bf16.msra.mxu0 0
    %201 = vmatprep.mubr.bf16.mxu0 0
    %202 = vmatmul.mubr.bf16.gmra.mrb[0].mxu0 %v126
    %v203 = vpop.f32.mrb[0].mxu0
    %v204 = vadd.f32 0.0, %v203
    %v205 = vpop.f32.mrb[0].mxu0
    %v206 = vadd.f32 0.0, %v205
    %v207 = vpop.f32.mrb[0].mxu0
    %v208 = vpop.f32.mrb[0].mxu0
    %209 = vdwg.mxu0
    %v214 = vunpack.c.l.b16 %v94
    %v215 = vunpack.c.h.b16 %v94
    %v216 = vunpack.c.l.b16 %v95
    %v217 = vunpack.c.h.b16 %v95
    %v218 = vunpack.c.l.b16 %v96
    %v219 = vunpack.c.h.b16 %v96
    %v220 = vunpack.c.l.b16 %v97
    %v221 = vunpack.c.h.b16 %v97
    %v222 = vpack.c.b16 %v218, %v214
    %v223 = vpack.c.b16 %v219, %v215
    %v224 = vpack.c.b16 %v220, %v216
    %v225 = vpack.c.b16 %v221, %v217
    %v231 = vsel %vm124, %v93, 0
    %233 = vmatprep.subr.bf16.mxu0 %v223
    %234 = vmatpush1.bf16.msra.mxu0 %v222
    %235 = vmatprep.subr.bf16.mxu0 0
    %236 = vmatpush1.bf16.msra.mxu0 0
    %237 = vmatprep.subr.bf16.mxu0 0
    %238 = vmatpush1.bf16.msra.mxu0 0
    %239 = vmatprep.subr.bf16.mxu0 0
    %240 = vmatpush1.bf16.msra.mxu0 0
    %241 = vmatprep.subr.bf16.mxu0 0
    %242 = vmatpush1.bf16.msra.mxu0 0
    %243 = vmatprep.subr.bf16.mxu0 0
    %244 = vmatpush1.bf16.msra.mxu0 0
    %245 = vmatprep.subr.bf16.mxu0 0
    %246 = vmatpush1.bf16.msra.mxu0 0
    %247 = vmatprep.subr.bf16.mxu0 0
    %248 = vmatpush1.bf16.msra.mxu0 0
    %249 = vmatprep.subr.bf16.mxu0 0
    %250 = vmatpush1.bf16.msra.mxu0 0
    %251 = vmatprep.subr.bf16.mxu0 0
    %252 = vmatpush1.bf16.msra.mxu0 0
    %253 = vmatprep.subr.bf16.mxu0 0
    %254 = vmatpush1.bf16.msra.mxu0 0
    %255 = vmatprep.subr.bf16.mxu0 0
    %256 = vmatpush1.bf16.msra.mxu0 0
    %257 = vmatprep.subr.bf16.mxu0 0
    %258 = vmatpush1.bf16.msra.mxu0 0
    %259 = vmatprep.subr.bf16.mxu0 0
    %260 = vmatpush1.bf16.msra.mxu0 0
    %261 = vmatprep.subr.bf16.mxu0 0
    %262 = vmatpush1.bf16.msra.mxu0 0
    %263 = vmatprep.subr.bf16.mxu0 0
    %264 = vmatpush1.bf16.msra.mxu0 0
    %265 = vmatprep.mubr.bf16.mxu0 0
    %266 = vmatmul.mubr.bf16.gmra.mrb[0].mxu0 %v231
    %v267 = vpop.f32.mrb[0].mxu0
    %v268 = vadd.f32 %v163, %v267
    %v269 = vpop.f32.mrb[0].mxu0
    %v270 = vadd.f32 %v165, %v269
    %v271 = vpop.f32.mrb[0].mxu0
    %v272 = vpop.f32.mrb[0].mxu0
    %273 = vdwg.mxu0
    %274 = vmatprep.subr.bf16.mxu0 %v225
    %275 = vmatpush1.bf16.msra.mxu0 %v224
    %276 = vmatprep.subr.bf16.mxu0 0
    %277 = vmatpush1.bf16.msra.mxu0 0
    %278 = vmatprep.subr.bf16.mxu0 0
    %279 = vmatpush1.bf16.msra.mxu0 0
    %280 = vmatprep.subr.bf16.mxu0 0
    %281 = vmatpush1.bf16.msra.mxu0 0
    %282 = vmatprep.subr.bf16.mxu0 0
    %283 = vmatpush1.bf16.msra.mxu0 0
    %284 = vmatprep.subr.bf16.mxu0 0
    %285 = vmatpush1.bf16.msra.mxu0 0
    %286 = vmatprep.subr.bf16.mxu0 0
    %287 = vmatpush1.bf16.msra.mxu0 0
    %288 = vmatprep.subr.bf16.mxu0 0
    %289 = vmatpush1.bf16.msra.mxu0 0
    %290 = vmatprep.subr.bf16.mxu0 0
    %291 = vmatpush1.bf16.msra.mxu0 0
    %292 = vmatprep.subr.bf16.mxu0 0
    %293 = vmatpush1.bf16.msra.mxu0 0
    %294 = vmatprep.subr.bf16.mxu0 0
    %295 = vmatpush1.bf16.msra.mxu0 0
    %296 = vmatprep.subr.bf16.mxu0 0
    %297 = vmatpush1.bf16.msra.mxu0 0
    %298 = vmatprep.subr.bf16.mxu0 0
    %299 = vmatpush1.bf16.msra.mxu0 0
    %300 = vmatprep.subr.bf16.mxu0 0
    %301 = vmatpush1.bf16.msra.mxu0 0
    %302 = vmatprep.subr.bf16.mxu0 0
    %303 = vmatpush1.bf16.msra.mxu0 0
    %304 = vmatprep.subr.bf16.mxu0 0
    %305 = vmatpush1.bf16.msra.mxu0 0
    %306 = vmatprep.mubr.bf16.mxu0 0
    %307 = vmatmul.mubr.bf16.gmra.mrb[0].mxu0 %v231
    %v308 = vpop.f32.mrb[0].mxu0
    %v309 = vadd.f32 %v204, %v308
    %v310 = vpop.f32.mrb[0].mxu0
    %v311 = vadd.f32 %v206, %v310
    %v312 = vpop.f32.mrb[0].mxu0
    %v313 = vpop.f32.mrb[0].mxu0
    %314 = vdwg.mxu0
    %v315 = vld [vmem:[%s4] sm:$0xf]
    %v317 = vlaneseq
    %v318 = vshrl.u32 %v317, 7
    %v319 = vsub.s32 0, %v318
    %v320 = vrot.slane %v315, %v319
    %v321 = vlaneseq
    %v322 = vshrl.u32 %v321, 7
    %v323 = vsub.s32 1, %v322
    %v324 = vrot.slane %v315, %v323
    %v325 = vlaneseq
    %v326 = vshrl.u32 %v325, 7
    %v327 = vsub.s32 2, %v326
    %v328 = vrot.slane %v315, %v327
    %v329 = vlaneseq
    %v330 = vshrl.u32 %v329, 7
    %v331 = vsub.s32 3, %v330
    %v332 = vrot.slane %v315, %v331
    %v337 = vadd.f32 %v268, %v320
    %v338 = vadd.f32 %v270, %v324
    %v339 = vadd.f32 %v309, %v328
    %v340 = vadd.f32 %v311, %v332
    %vm341 = vcmp.gt.f32.partialorder %v337, 0.0
    %vm342 = vcmp.gt.f32.partialorder %v338, 0.0
    %vm343 = vcmp.gt.f32.partialorder %v339, 0.0
    %vm344 = vcmp.gt.f32.partialorder %v340, 0.0
    %v345 = vmul.f32 %v337, 0.01
    %v346 = vmul.f32 %v338, 0.01
    %v347 = vmul.f32 %v339, 0.01
    %v348 = vmul.f32 %v340, 0.01
    %v349 = vsel %vm341, %v337, %v345
    %v350 = vsel %vm342, %v338, %v346
    %v351 = vsel %vm343, %v339, %v347
    %v352 = vsel %vm344, %v340, %v348
    %v353 = vpack.c.bf16 %v349, %v349
    %v354 = vpack.c.bf16 %v350, %v350
    %v355 = vpack.c.bf16 %v351, %v351
    %v356 = vpack.c.bf16 %v352, %v352
    %v357 = vld [vmem:[#allocation10] sm:$0xf]
    %v358 = vld [vmem:[#allocation10 + $0x4] sm:$0xf]
    %v359 = vld [vmem:[#allocation10 + $0x8] sm:$0xf]
    %v360 = vld [vmem:[#allocation10 + $0xc] sm:$0xf]
    %v361 = vld [vmem:[#allocation10 + $0x10] sm:$0xf]
    %v362 = vld [vmem:[#allocation10 + $0x14] sm:$0xf]
    %v363 = vld [vmem:[#allocation10 + $0x18] sm:$0xf]
    %v364 = vld [vmem:[#allocation10 + $0x1c] sm:$0xf]
    %v365 = vld [vmem:[#allocation10 + $0x20] sm:$0xf]
    %v366 = vld [vmem:[#allocation10 + $0x24] sm:$0xf]
    %v367 = vld [vmem:[#allocation10 + $0x28] sm:$0xf]
    %v368 = vld [vmem:[#allocation10 + $0x2c] sm:$0xf]
    %v369 = vld [vmem:[#allocation10 + $0x30] sm:$0xf]
    %v370 = vld [vmem:[#allocation10 + $0x34] sm:$0xf]
    %v371 = vld [vmem:[#allocation10 + $0x38] sm:$0xf]
    %v372 = vld [vmem:[#allocation10 + $0x3c] sm:$0xf]
    %v373 = vld [vmem:[#allocation10 + $0x40] sm:$0xf]
    %v374 = vld [vmem:[#allocation10 + $0x44] sm:$0xf]
    %v375 = vld [vmem:[#allocation10 + $0x48] sm:$0xf]
    %v376 = vld [vmem:[#allocation10 + $0x4c] sm:$0xf]
    %v377 = vld [vmem:[#allocation10 + $0x50] sm:$0xf]
    %v378 = vld [vmem:[#allocation10 + $0x54] sm:$0xf]
    %v379 = vld [vmem:[#allocation10 + $0x58] sm:$0xf]
    %v380 = vld [vmem:[#allocation10 + $0x5c] sm:$0xf]
    %v381 = vld [vmem:[#allocation10 + $0x60] sm:$0xf]
    %v382 = vld [vmem:[#allocation10 + $0x64] sm:$0xf]
    %v383 = vld [vmem:[#allocation10 + $0x68] sm:$0xf]
    %v384 = vld [vmem:[#allocation10 + $0x6c] sm:$0xf]
    %v385 = vld [vmem:[#allocation10 + $0x70] sm:$0xf]
    %v386 = vld [vmem:[#allocation10 + $0x74] sm:$0xf]
    %v387 = vld [vmem:[#allocation10 + $0x78] sm:$0xf]
    %v388 = vld [vmem:[#allocation10 + $0x7c] sm:$0xf]
    %v389 = vld [vmem:[#allocation10 + $0x80] sm:$0xf]
    %v390 = vld [vmem:[#allocation10 + $0x84] sm:$0xf]
    %v391 = vld [vmem:[#allocation10 + $0x88] sm:$0xf]
    %v392 = vld [vmem:[#allocation10 + $0x8c] sm:$0xf]
    %v393 = vld [vmem:[#allocation10 + $0x90] sm:$0xf]
    %v394 = vld [vmem:[#allocation10 + $0x94] sm:$0xf]
    %v395 = vld [vmem:[#allocation10 + $0x98] sm:$0xf]
    %v396 = vld [vmem:[#allocation10 + $0x9c] sm:$0xf]
    %v397 = vld [vmem:[#allocation10 + $0xa0] sm:$0xf]
    %v398 = vld [vmem:[#allocation10 + $0xa4] sm:$0xf]
    %v399 = vld [vmem:[#allocation10 + $0xa8] sm:$0xf]
    %v400 = vld [vmem:[#allocation10 + $0xac] sm:$0xf]
    %v401 = vld [vmem:[#allocation10 + $0xb0] sm:$0xf]
    %v402 = vld [vmem:[#allocation10 + $0xb4] sm:$0xf]
    %v403 = vld [vmem:[#allocation10 + $0xb8] sm:$0xf]
    %v404 = vld [vmem:[#allocation10 + $0xbc] sm:$0xf]
    %v405 = vld [vmem:[#allocation10 + $0xc0] sm:$0xf]
    %v406 = vld [vmem:[#allocation10 + $0xc4] sm:$0xf]
    %v407 = vld [vmem:[#allocation10 + $0xc8] sm:$0xf]
    %v408 = vld [vmem:[#allocation10 + $0xcc] sm:$0xf]
    %v409 = vld [vmem:[#allocation10 + $0xd0] sm:$0xf]
    %v410 = vld [vmem:[#allocation10 + $0xd4] sm:$0xf]
    %v411 = vld [vmem:[#allocation10 + $0xd8] sm:$0xf]
    %v412 = vld [vmem:[#allocation10 + $0xdc] sm:$0xf]
    %v413 = vld [vmem:[#allocation10 + $0xe0] sm:$0xf]
    %v414 = vld [vmem:[#allocation10 + $0xe4] sm:$0xf]
    %v415 = vld [vmem:[#allocation10 + $0xe8] sm:$0xf]
    %v416 = vld [vmem:[#allocation10 + $0xec] sm:$0xf]
    %v417 = vld [vmem:[#allocation10 + $0xf0] sm:$0xf]
    %v418 = vld [vmem:[#allocation10 + $0xf4] sm:$0xf]
    %v419 = vld [vmem:[#allocation10 + $0xf8] sm:$0xf]
    %v420 = vld [vmem:[#allocation10 + $0xfc] sm:$0xf]
    %v421 = vld [vmem:[%s6] sm:$0x1]
    %v423 = vlaneseq
    %v424 = vshrl.u32 %v423, 7
    %v425 = vsub.s32 0, %v424
    %v426 = vrot.slane %v421, %v425
    %v492 = vunpack.c.l.b16 %v357
    %v493 = vunpack.c.l.b16 %v358
    %v494 = vunpack.c.l.b16 %v359
    %v495 = vunpack.c.l.b16 %v360
    %v496 = vunpack.c.l.b16 %v361
    %v497 = vunpack.c.l.b16 %v362
    %v498 = vunpack.c.l.b16 %v363
    %v499 = vunpack.c.l.b16 %v364
    %v500 = vunpack.c.l.b16 %v365
    %v501 = vunpack.c.l.b16 %v366
    %v502 = vunpack.c.l.b16 %v367
    %v503 = vunpack.c.l.b16 %v368
    %v504 = vunpack.c.l.b16 %v369
    %v505 = vunpack.c.l.b16 %v370
    %v506 = vunpack.c.l.b16 %v371
    %v507 = vunpack.c.l.b16 %v372
    %v508 = vunpack.c.l.b16 %v373
    %v509 = vunpack.c.l.b16 %v374
    %v510 = vunpack.c.l.b16 %v375
    %v511 = vunpack.c.l.b16 %v376
    %v512 = vunpack.c.l.b16 %v377
    %v513 = vunpack.c.l.b16 %v378
    %v514 = vunpack.c.l.b16 %v379
    %v515 = vunpack.c.l.b16 %v380
    %v516 = vunpack.c.l.b16 %v381
    %v517 = vunpack.c.l.b16 %v382
    %v518 = vunpack.c.l.b16 %v383
    %v519 = vunpack.c.l.b16 %v384
    %v520 = vunpack.c.l.b16 %v385
    %v521 = vunpack.c.l.b16 %v386
    %v522 = vunpack.c.l.b16 %v387
    %v523 = vunpack.c.l.b16 %v388
    %v524 = vunpack.c.l.b16 %v389
    %v525 = vunpack.c.l.b16 %v390
    %v526 = vunpack.c.l.b16 %v391
    %v527 = vunpack.c.l.b16 %v392
    %v528 = vunpack.c.l.b16 %v393
    %v529 = vunpack.c.l.b16 %v394
    %v530 = vunpack.c.l.b16 %v395
    %v531 = vunpack.c.l.b16 %v396
    %v532 = vunpack.c.l.b16 %v397
    %v533 = vunpack.c.l.b16 %v398
    %v534 = vunpack.c.l.b16 %v399
    %v535 = vunpack.c.l.b16 %v400
    %v536 = vunpack.c.l.b16 %v401
    %v537 = vunpack.c.l.b16 %v402
    %v538 = vunpack.c.l.b16 %v403
    %v539 = vunpack.c.l.b16 %v404
    %v540 = vunpack.c.l.b16 %v405
    %v541 = vunpack.c.l.b16 %v406
    %v542 = vunpack.c.l.b16 %v407
    %v543 = vunpack.c.l.b16 %v408
    %v544 = vunpack.c.l.b16 %v409
    %v545 = vunpack.c.l.b16 %v410
    %v546 = vunpack.c.l.b16 %v411
    %v547 = vunpack.c.l.b16 %v412
    %v548 = vunpack.c.l.b16 %v413
    %v549 = vunpack.c.l.b16 %v414
    %v550 = vunpack.c.l.b16 %v415
    %v551 = vunpack.c.l.b16 %v416
    %v552 = vunpack.c.l.b16 %v417
    %v553 = vunpack.c.l.b16 %v418
    %v554 = vunpack.c.l.b16 %v419
    %v555 = vunpack.c.l.b16 %v420
    %v556 = vpack.c.b16 %v493, %v492
    %v557 = vpack.c.b16 %v495, %v494
    %v558 = vpack.c.b16 %v497, %v496
    %v559 = vpack.c.b16 %v499, %v498
    %v560 = vpack.c.b16 %v501, %v500
    %v561 = vpack.c.b16 %v503, %v502
    %v562 = vpack.c.b16 %v505, %v504
    %v563 = vpack.c.b16 %v507, %v506
    %v564 = vpack.c.b16 %v509, %v508
    %v565 = vpack.c.b16 %v511, %v510
    %v566 = vpack.c.b16 %v513, %v512
    %v567 = vpack.c.b16 %v515, %v514
    %v568 = vpack.c.b16 %v517, %v516
    %v569 = vpack.c.b16 %v519, %v518
    %v570 = vpack.c.b16 %v521, %v520
    %v571 = vpack.c.b16 %v523, %v522
    %v572 = vpack.c.b16 %v525, %v524
    %v573 = vpack.c.b16 %v527, %v526
    %v574 = vpack.c.b16 %v529, %v528
    %v575 = vpack.c.b16 %v531, %v530
    %v576 = vpack.c.b16 %v533, %v532
    %v577 = vpack.c.b16 %v535, %v534
    %v578 = vpack.c.b16 %v537, %v536
    %v579 = vpack.c.b16 %v539, %v538
    %v580 = vpack.c.b16 %v541, %v540
    %v581 = vpack.c.b16 %v543, %v542
    %v582 = vpack.c.b16 %v545, %v544
    %v583 = vpack.c.b16 %v547, %v546
    %v584 = vpack.c.b16 %v549, %v548
    %v585 = vpack.c.b16 %v551, %v550
    %v586 = vpack.c.b16 %v553, %v552
    %v587 = vpack.c.b16 %v555, %v554
    %620 = vmatprep.subr.bf16.mxu0 0
    %621 = vmatpush1.bf16.msra.mxu0 %v556
    %622 = vmatprep.subr.bf16.mxu0 0
    %623 = vmatpush1.bf16.msra.mxu0 %v557
    %624 = vmatprep.subr.bf16.mxu0 0
    %625 = vmatpush1.bf16.msra.mxu0 %v558
    %626 = vmatprep.subr.bf16.mxu0 0
    %627 = vmatpush1.bf16.msra.mxu0 %v559
    %628 = vmatprep.subr.bf16.mxu0 0
    %629 = vmatpush1.bf16.msra.mxu0 %v560
    %630 = vmatprep.subr.bf16.mxu0 0
    %631 = vmatpush1.bf16.msra.mxu0 %v561
    %632 = vmatprep.subr.bf16.mxu0 0
    %633 = vmatpush1.bf16.msra.mxu0 %v562
    %634 = vmatprep.subr.bf16.mxu0 0
    %635 = vmatpush1.bf16.msra.mxu0 %v563
    %636 = vmatprep.subr.bf16.mxu0 0
    %637 = vmatpush1.bf16.msra.mxu0 %v564
    %638 = vmatprep.subr.bf16.mxu0 0
    %639 = vmatpush1.bf16.msra.mxu0 %v565
    %640 = vmatprep.subr.bf16.mxu0 0
    %641 = vmatpush1.bf16.msra.mxu0 %v566
    %642 = vmatprep.subr.bf16.mxu0 0
    %643 = vmatpush1.bf16.msra.mxu0 %v567
    %644 = vmatprep.subr.bf16.mxu0 0
    %645 = vmatpush1.bf16.msra.mxu0 %v568
    %646 = vmatprep.subr.bf16.mxu0 0
    %647 = vmatpush1.bf16.msra.mxu0 %v569
    %648 = vmatprep.subr.bf16.mxu0 0
    %649 = vmatpush1.bf16.msra.mxu0 %v570
    %650 = vmatprep.subr.bf16.mxu0 0
    %651 = vmatpush1.bf16.msra.mxu0 %v571
    %652 = vmatprep.mubr.bf16.mxu0 %v354
    %653 = vmatmul.mubr.bf16.gmra.mrb[0].mxu0 %v353
    %v654 = vpop.f32.mrb[0].mxu0
    %v655 = vadd.f32 %v426, %v654
    %v656 = vpop.f32.mrb[0].mxu0
    %v657 = vpop.f32.mrb[0].mxu0
    %v658 = vpop.f32.mrb[0].mxu0
    %659 = vdwg.mxu0
    %660 = vmatprep.subr.bf16.mxu0 0
    %661 = vmatpush1.bf16.msra.mxu0 %v572
    %662 = vmatprep.subr.bf16.mxu0 0
    %663 = vmatpush1.bf16.msra.mxu0 %v573
    %664 = vmatprep.subr.bf16.mxu0 0
    %665 = vmatpush1.bf16.msra.mxu0 %v574
    %666 = vmatprep.subr.bf16.mxu0 0
    %667 = vmatpush1.bf16.msra.mxu0 %v575
    %668 = vmatprep.subr.bf16.mxu0 0
    %669 = vmatpush1.bf16.msra.mxu0 %v576
    %670 = vmatprep.subr.bf16.mxu0 0
    %671 = vmatpush1.bf16.msra.mxu0 %v577
    %672 = vmatprep.subr.bf16.mxu0 0
    %673 = vmatpush1.bf16.msra.mxu0 %v578
    %674 = vmatprep.subr.bf16.mxu0 0
    %675 = vmatpush1.bf16.msra.mxu0 %v579
    %676 = vmatprep.subr.bf16.mxu0 0
    %677 = vmatpush1.bf16.msra.mxu0 %v580
    %678 = vmatprep.subr.bf16.mxu0 0
    %679 = vmatpush1.bf16.msra.mxu0 %v581
    %680 = vmatprep.subr.bf16.mxu0 0
    %681 = vmatpush1.bf16.msra.mxu0 %v582
    %682 = vmatprep.subr.bf16.mxu0 0
    %683 = vmatpush1.bf16.msra.mxu0 %v583
    %684 = vmatprep.subr.bf16.mxu0 0
    %685 = vmatpush1.bf16.msra.mxu0 %v584
    %686 = vmatprep.subr.bf16.mxu0 0
    %687 = vmatpush1.bf16.msra.mxu0 %v585
    %688 = vmatprep.subr.bf16.mxu0 0
    %689 = vmatpush1.bf16.msra.mxu0 %v586
    %690 = vmatprep.subr.bf16.mxu0 0
    %691 = vmatpush1.bf16.msra.mxu0 %v587
    %692 = vmatprep.mubr.bf16.mxu0 %v356
    %693 = vmatmul.mubr.bf16.gmra.mrb[0].mxu0 %v355
    %v694 = vpop.f32.mrb[0].mxu0
    %v695 = vadd.f32 %v655, %v694
    %v696 = vpop.f32.mrb[0].mxu0
    %v697 = vpop.f32.mrb[0].mxu0
    %v698 = vpop.f32.mrb[0].mxu0
    %699 = vdwg.mxu0
    %700 = vst [vmem:[#allocation11] sm:$0xff] %v695
    // Predicated region
    $region50: #{tpu_custom_call.1} parent=1 // pred_check
      _
    $region51: #{tpu_custom_call.1} parent=1 // pred_check_branch
      %702 = sbr.rel (0) target = $region53
    $region52: #{tpu_custom_call.1} parent=1 // pred_region
      %s704 = ssub.s32 128, 128
      %705 = vsyncadd [#allocation4], %s704
      %s707 = sshll.u32 [#allocation11], 4
      %s708 = int_to_ptr.vmem [resolvable:$true] %s707
      %710 = dma.vmem_to_hbm [thread:$0]  %s708, 128, %s7, [#allocation4]
    $region53: #{tpu_custom_call.1} parent=1 // pred_fallthru
      _
    // Predicated region
    $region54: #{tpu_custom_call.1} parent=1 // pred_check
      _
    $region55: #{tpu_custom_call.1} parent=1 // pred_check_branch
      %712 = sbr.rel (0) target = $region57
    $region56: #{tpu_custom_call.1} parent=1 // pred_region
      %713 = dma.done [#allocation4], 128
    $region57: #{tpu_custom_call.1} parent=1 // pred_fallthru
      _
    %714 = vsyncpa [#allocation3], 1
    %715 = vsyncpa [#allocation6], 1
    %716 = vsyncpa [#allocation9], 1
    %717 = vsyncpa [#allocation4], 1

</llo_original>
